<compile_context>
chip_gen: v6e
topology: v6e:2x2x1
jax: 0.10.0
libtpu: 0.0.40
codegen_flags: <defaults>
</compile_context>

<pallas_src>
import jax
import jax.numpy as jnp
from jax.experimental import pallas as pl
from jax.experimental.pallas import tpu as pltpu

_INV_SQRT2 = 0.7071067811865476


def _decoder_recon_kernel(x_ref, w1_ref, b1_ref, wbd_ref, b2_ref, o_ref):
    # x_ref   : (R, TN*D)  lane-dense activation slab, R = L (per-batch) or B*L (folded)
    # w1_ref  : (R, R)     channel-mixing (1x1 conv) weight, kron(I_B, w1) when folded
    # b1_ref  : (R, 1)     conv bias (f32), broadcast over lanes
    # wbd_ref : (TN*D, TN*in_dim)  block-diagonal kron(I_tn, w2)
    # b2_ref  : (1, TN*in_dim)     tiled linear bias (f32)
    x = x_ref[...]
    x32 = x if x.dtype == jnp.float32 else x.astype(jnp.float32)

    # 1x1 conv over the channel dim: a single lane-dense MXU matmul, f32 accumulation.
    y = jnp.dot(w1_ref[...], x, preferred_element_type=jnp.float32) + b1_ref[...]
    # Exact GELU (erf), matching torch.nn.GELU(approximate='none'); erf goes to the EUP.
    y = 0.5 * y * (1.0 + jax.lax.erf(y * _INV_SQRT2))
    rep = y + x32                                    # residual (hasRes=True)

    # Per-node Linear(D -> in_dim) applied to the packed slab through the block-diagonal
    # weight: the result comes out already packed as (R, TN*in_dim) -> one wide store.
    wbd = wbd_ref[...]
    rep_mm = rep if wbd.dtype == jnp.float32 else rep.astype(wbd.dtype)
    z = jnp.dot(rep_mm, wbd, preferred_element_type=jnp.float32) + b2_ref[...]
    o_ref[...] = z.astype(o_ref.dtype)


def _tensorcores_per_chip():
    try:
        kind = jax.devices()[0].device_kind.lower()
    except Exception:
        return 1
    return 2 if ("v7" in kind or "7x" in kind) else 1


def _vmem_capacity_bytes():
    try:
        return int(pltpu.get_tpu_info().vmem_capacity_bytes)
    except Exception:
        return 64 * 1024 * 1024        # conservative: v7x has the smallest VMEM (64 MiB)


def _default_tn(N, D, in_dim):
    """Smallest node tile whose packed output width is one full 128-lane register."""
    if in_dim > 0 and 128 % in_dim == 0:
        target = 128 // in_dim
        if target < N and N % target == 0 and (target * D) % 128 == 0:
            return target
    return N


def prepare_decoder_recon(w1, b1, w2, b2, *, batch, tn, fold_batch,
                          compute_dtype=jnp.float32):
    """Pack weights for the kernel.  Call ONCE per weight set / config: the kron/tile
    construction is a device-side XLA op whose HBM round trip should not be paid every
    forward call."""
    L = w1.shape[0]
    _, in_dim = w2.shape
    if fold_batch:
        w1p = jnp.kron(jnp.eye(batch, dtype=w1.dtype), w1)         # (B*L, B*L)
        b1p = jnp.tile(b1, batch)                                   # (B*L,)
        R = batch * L
    else:
        w1p, b1p, R = w1, b1, L
    b1p = b1p.reshape(R, 1).astype(jnp.float32)
    wbd = jnp.kron(jnp.eye(tn, dtype=w2.dtype), w2)                 # (tn*D, tn*in_dim)
    b2p = jnp.tile(b2, tn).reshape(1, tn * in_dim).astype(jnp.float32)
    return w1p.astype(compute_dtype), b1p, wbd.astype(compute_dtype), b2p


def decoder_recon(x, w1, b1, w2, b2, *, tn=None, fold_batch=None,
                  compute_dtype=jnp.float32, packed_params=None):
    """x: (B, L, N, D); w1: (L, L) 1x1-conv weight; b1: (L,);
    w2: (D, in_dim) (torch Linear weight, transposed); b2: (in_dim,).
    Returns (B, L, N, in_dim) == Decoder_recon.forward(x) with hasRes=True."""
    B, L, N, D = x.shape
    in_dim = w2.shape[1]

    if tn is None:
        tn = _default_tn(N, D, in_dim)
    assert N % tn == 0, "tn must divide num_nodes"
    nt = N // tn
    assert nt == 1 or (tn * D % 128 == 0 and tn * in_dim % 128 == 0), (
        "node tile must keep blocks (8,128)-aligned and stores lane-dense")

    if fold_batch is None:
        # v5e/v6e (1 TC/chip): fold the batch -> one bigger slab, fewer grid steps.
        # v7x (2 TCs/chip): keep B as a parallel grid axis so the second core gets work.
        fold_batch = (_tensorcores_per_chip() < 2) or (B < 2)

    if packed_params is None:
        packed_params = prepare_decoder_recon(
            w1, b1, w2, b2, batch=B, tn=tn, fold_batch=fold_batch,
            compute_dtype=compute_dtype)
    w1p, b1p, wbd, b2p = packed_params

    out_dtype = x.dtype
    if x.dtype != jnp.dtype(compute_dtype):
        x = x.astype(compute_dtype)

    R = B * L if fold_batch else L
    x_item = jnp.dtype(compute_dtype).itemsize
    o_item = jnp.dtype(out_dtype).itemsize

    # Single-buffer the grid-invariant weights once they are big enough to matter
    # (halves the dominant VMEM residency at production tn); tiny weights stay on the
    # default path.
    wbd_bytes = wbd.size * wbd.dtype.itemsize
    single_buffer_weights = wbd_bytes > (1 << 20)
    weight_bufs = 1 if single_buffer_weights else 2

    # VMEM budget: raise the scoped limit only when the estimate calls for it, with
    # headroom against the chip's physical capacity (64 MiB on v7x, 128 MiB v5e/v6e).
    est = 2 * R * (tn * D * x_item + tn * in_dim * o_item)          # x/out double-buffers
    est += weight_bufs * (w1p.size * w1p.dtype.itemsize + wbd_bytes
                          + (b1p.size + b2p.size) * 4)
    vmem_limit = None
    if est > 24 * 1024 * 1024:
        vmem_limit = min(int(est * 1.5), int(_vmem_capacity_bytes() * 0.9))

    def _wspec(shape, cmap):
        if single_buffer_weights:
            return pl.BlockSpec(shape, cmap, pipeline_mode=pl.Buffered(1))
        return pl.BlockSpec(shape, cmap)

    if fold_batch:
        xr = x.reshape(B * L, N * D)                 # free view (no transpose)
        grid = (nt,)
        cmap = lambda n: (0, 0)
        in_specs = [
            pl.BlockSpec((R, tn * D), lambda n: (0, n)),
            _wspec((R, R), cmap),
            _wspec((R, 1), cmap),
            _wspec((tn * D, tn * in_dim), cmap),
            _wspec((1, tn * in_dim), cmap),
        ]
        out_spec = pl.BlockSpec((R, tn * in_dim), lambda n: (0, n))
        out_shape = jax.ShapeDtypeStruct((B * L, N * in_dim), out_dtype)
        dims = ("parallel",)
    else:
        xr = x.reshape(B, L, N * D)                  # free view (no transpose)
        grid = (B, nt)
        cmap = lambda b, n: (0, 0)
        in_specs = [
            pl.BlockSpec((None, L, tn * D), lambda b, n: (b, 0, n)),
            _wspec((L, L), cmap),
            _wspec((L, 1), cmap),
            _wspec((tn * D, tn * in_dim), cmap),
            _wspec((1, tn * in_dim), cmap),
        ]
        out_spec = pl.BlockSpec((None, L, tn * in_dim), lambda b, n: (b, 0, n))
        out_shape = jax.ShapeDtypeStruct((B, L, N * in_dim), out_dtype)
        dims = ("parallel", "parallel")

    out = pl.pallas_call(
        _decoder_recon_kernel,
        out_shape=out_shape,
        grid=grid,
        in_specs=in_specs,
        out_specs=out_spec,
        compiler_params=pltpu.CompilerParams(
            dimension_semantics=dims, vmem_limit_bytes=vmem_limit),
    )(xr, w1p, b1p, wbd, b2p)

    # Free reshape back to (B, L, N, in_dim) -- no transpose needed.
    return out.reshape(B, L, N, in_dim)


def _reference(x, w1, b1, w2, b2):
    # Pure-JAX reference of the PyTorch forward.
    y = jnp.einsum("oc,bchw->bohw", w1, x) + b1[None, :, None, None]
    y = 0.5 * y * (1.0 + jax.lax.erf(y * _INV_SQRT2))            # exact GELU
    rep = y + x
    return jnp.einsum("blnd,di->blni", rep, w2) + b2


if __name__ == "__main__":
    # Module hyperparameters (small, consistent with the forward pass)
    B = 2             # batch
    input_length = 8  # L  (conv channels)
    num_nodes = 16    # N
    d_model = 32      # D
    in_dim = 4        # Linear output dim

    key = jax.random.PRNGKey(0)
    kx, k1, k2, k3, k4 = jax.random.split(key, 5)

    x = jax.random.normal(kx, (B, input_length, num_nodes, d_model), dtype=jnp.float32)

    # Deterministic synthetic parameters (shapes match the PyTorch module):
    #   end_conv1: Conv2d(L, L, 1) -> weight (L, L, 1, 1) stored as (L, L), bias (L,)
    #   end_conv2: Linear(D, in_dim) -> weight (in_dim, D) stored transposed as
    #              (D, in_dim), bias (in_dim,)
    w1 = jax.random.normal(k1, (input_length, input_length), dtype=jnp.float32) * 0.1
    b1 = jax.random.normal(k2, (input_length,), dtype=jnp.float32) * 0.1
    w2 = jax.random.normal(k3, (d_model, in_dim), dtype=jnp.float32) * 0.1
    b2 = jax.random.normal(k4, (in_dim,), dtype=jnp.float32) * 0.1

    out = decoder_recon(x, w1, b1, w2, b2)
    jax.block_until_ready(out)

    ref = _reference(x, w1, b1, w2, b2)
    assert out.shape == (B, input_length, num_nodes, in_dim), out.shape
    assert jnp.allclose(out, ref, atol=1e-5, rtol=1e-5), float(jnp.max(jnp.abs(out - ref)))

    print("KERNEL_OK")
</pallas_src>

<mosaic_0001>
module attributes {stable_mosaic.version = 11 : i64} {
  func.func @_decoder_recon_kernel(%arg0: i32, %arg1: memref<16x512xf32, #tpu.memory_space<vmem>>, %arg2: memref<16x16xf32, #tpu.memory_space<vmem>>, %arg3: memref<16x1xf32, #tpu.memory_space<vmem>>, %arg4: memref<512x64xf32, #tpu.memory_space<vmem>>, %arg5: memref<1x64xf32, #tpu.memory_space<vmem>>, %arg6: memref<16x64xf32, #tpu.memory_space<vmem>>) attributes {dimension_semantics = [#tpu.dimension_semantics<parallel>], iteration_bounds = array<i64: 1>, scalar_prefetch = 0 : i64, scratch_operands = 0 : i64, tpu.core_type = #tpu.core_type<tc>, window_params = [{transform_indices = @transform_0, window_bounds = array<i64: 16, 512>}, {pipeline_mode = #tpu.pipeline_mode<synchronous>, transform_indices = @transform_1, window_bounds = array<i64: 16, 16>}, {pipeline_mode = #tpu.pipeline_mode<synchronous>, transform_indices = @transform_2, window_bounds = array<i64: 16, 1>}, {pipeline_mode = #tpu.pipeline_mode<synchronous>, transform_indices = @transform_3, window_bounds = array<i64: 512, 64>}, {pipeline_mode = #tpu.pipeline_mode<synchronous>, transform_indices = @transform_4, window_bounds = array<i64: 1, 64>}, {transform_indices = @transform_5, window_bounds = array<i64: 16, 64>}]} {
    %c0 = arith.constant 0 : index
    %c0_0 = arith.constant 0 : index
    %0 = vector.load %arg1[%c0, %c0_0] : memref<16x512xf32, #tpu.memory_space<vmem>>, vector<16x512xf32>
    %c0_1 = arith.constant 0 : index
    %c0_2 = arith.constant 0 : index
    %1 = vector.load %arg2[%c0_1, %c0_2] : memref<16x16xf32, #tpu.memory_space<vmem>>, vector<16x16xf32>
    %cst = arith.constant dense<0.000000e+00> : vector<16x512xf32>
    %2 = tpu.matmul %1, %0, %cst {dimension_numbers = #tpu.dot_dimension_numbers<[1], [0], [0], [1], [0, 0, 1, 1], [], []>} : vector<16x16xf32>, vector<16x512xf32>, vector<16x512xf32> -> vector<16x512xf32>
    %c0_3 = arith.constant 0 : index
    %c0_4 = arith.constant 0 : index
    %3 = vector.load %arg3[%c0_3, %c0_4] : memref<16x1xf32, #tpu.memory_space<vmem>>, vector<16x1xf32>
    %4 = vector.broadcast %3 : vector<16x1xf32> to vector<16x512xf32>
    %5 = arith.addf %2, %4 : vector<16x512xf32>
    %cst_5 = arith.constant 5.000000e-01 : f32
    %6 = vector.broadcast %cst_5 : f32 to vector<16x512xf32>
    %7 = arith.mulf %6, %5 : vector<16x512xf32>
    %cst_6 = arith.constant 0.707106769 : f32
    %8 = vector.broadcast %cst_6 : f32 to vector<16x512xf32>
    %9 = arith.mulf %5, %8 : vector<16x512xf32>
    %10 = math.erf %9 : vector<16x512xf32>
    %cst_7 = arith.constant 1.000000e+00 : f32
    %11 = vector.broadcast %cst_7 : f32 to vector<16x512xf32>
    %12 = arith.addf %11, %10 : vector<16x512xf32>
    %13 = arith.mulf %7, %12 : vector<16x512xf32>
    %14 = arith.addf %13, %0 : vector<16x512xf32>
    %c0_8 = arith.constant 0 : index
    %c0_9 = arith.constant 0 : index
    %15 = vector.load %arg4[%c0_8, %c0_9] : memref<512x64xf32, #tpu.memory_space<vmem>>, vector<512x64xf32>
    %cst_10 = arith.constant dense<0.000000e+00> : vector<16x64xf32>
    %16 = tpu.matmul %14, %15, %cst_10 {dimension_numbers = #tpu.dot_dimension_numbers<[1], [0], [0], [1], [0, 0, 1, 1], [], []>} : vector<16x512xf32>, vector<512x64xf32>, vector<16x64xf32> -> vector<16x64xf32>
    %c0_11 = arith.constant 0 : index
    %c0_12 = arith.constant 0 : index
    %17 = vector.load %arg5[%c0_11, %c0_12] : memref<1x64xf32, #tpu.memory_space<vmem>>, vector<1x64xf32>
    %18 = vector.broadcast %17 : vector<1x64xf32> to vector<16x64xf32>
    %19 = arith.addf %16, %18 : vector<16x64xf32>
    %c0_13 = arith.constant 0 : index
    %c0_14 = arith.constant 0 : index
    %20 = vector.load %arg6[%c0_13, %c0_14] : memref<16x64xf32, #tpu.memory_space<vmem>>, vector<16x64xf32>
    tpu.vector_store %arg6[%c0_13, %c0_14], %19 {strides = array<i32>} : memref<16x64xf32, #tpu.memory_space<vmem>>, vector<16x64xf32>,
    return
  }
  func.func @transform_0(%arg0: i32) -> (i32, i32) {
    %c0_i32 = arith.constant 0 : i32
    %c0_i32_0 = arith.constant 0 : i32
    return %c0_i32, %arg0 : i32, i32
  }
  func.func @transform_1(%arg0: i32) -> (i32, i32) {
    %c0_i32 = arith.constant 0 : i32
    %c0_i32_0 = arith.constant 0 : i32
    %c0_i32_1 = arith.constant 0 : i32
    return %c0_i32, %c0_i32_0 : i32, i32
  }
  func.func @transform_2(%arg0: i32) -> (i32, i32) {
    %c0_i32 = arith.constant 0 : i32
    %c0_i32_0 = arith.constant 0 : i32
    %c0_i32_1 = arith.constant 0 : i32
    return %c0_i32, %c0_i32_0 : i32, i32
  }
  func.func @transform_3(%arg0: i32) -> (i32, i32) {
    %c0_i32 = arith.constant 0 : i32
    %c0_i32_0 = arith.constant 0 : i32
    %c0_i32_1 = arith.constant 0 : i32
    return %c0_i32, %c0_i32_0 : i32, i32
  }
  func.func @transform_4(%arg0: i32) -> (i32, i32) {
    %c0_i32 = arith.constant 0 : i32
    %c0_i32_0 = arith.constant 0 : i32
    %c0_i32_1 = arith.constant 0 : i32
    return %c0_i32, %c0_i32_0 : i32, i32
  }
  func.func @transform_5(%arg0: i32) -> (i32, i32) {
    %c0_i32 = arith.constant 0 : i32
    %c0_i32_0 = arith.constant 0 : i32
    return %c0_i32, %arg0 : i32, i32
  }
}

</mosaic_0001>

<llo_original>
// kernel: tpu_custom_call.1
$region0: #{tpu_custom_call.1}
  #allocation0 [shape = 'u32[]', space=smem, size = 0x4, offset = 0x4, fixed_abs, tag = 'smem constant byte address 0x4 - core index']
  #allocation1 [shape = 'u32[144,128]{1,0:T(1,128)}', space=vmem, size = 0x12000, scoped, tag = 'internal scratch']
  %s0 = inlined_call_operand.vmem [shape: f32[16,512], index: 0, kind: input, shape index: {}]
  %s1 = inlined_call_operand.vmem [shape: f32[16,16], index: 1, kind: input, shape index: {}]
  %s2 = inlined_call_operand.vmem [shape: f32[16,1], index: 2, kind: input, shape index: {}]
  %s3 = inlined_call_operand.vmem [shape: f32[512,64], index: 3, kind: input, shape index: {}]
  %s4 = inlined_call_operand.vmem [shape: f32[1,64], index: 4, kind: input, shape index: {}]
  %s5 = inlined_call_operand.hbm [shape: f32[16,64], index: 5, kind: output, shape index: {}]
  %s6 = sld [smem:[#allocation0]]
  $region30: #{tpu_custom_call.1} parent=0
    _
  %s8 = ssub.s32 1, %s6
  %s9 = scalar_select 0, %s8, %s6
  $region1: #{tpu_custom_call.1} parent=0
    #allocation2 [shape = 'u8[8192]{0}', space=vmem, size = 0x2000, scoped, tag = 'output window, operand 0, single buffered']
    #allocation3 [shape = 's32[1]{0}', space=sflag, size = 0x4, scoped, tag = 'scoped memory for tpu_custom_call.1']
    %10 = vsyncpa [#allocation3], 0
    // Predicated region
    $region2: #{tpu_custom_call.1} parent=1 // pred_check
      _
    $region3: #{tpu_custom_call.1} parent=1 // pred_check_branch
      %12 = sbr.rel (0) target = $region5
    $region4: #{tpu_custom_call.1} parent=1 // pred_region
      _
    $region5: #{tpu_custom_call.1} parent=1 // pred_fallthru
      _
    // Predicated region
    $region6: #{tpu_custom_call.1} parent=1 // pred_check
      _
    $region7: #{tpu_custom_call.1} parent=1 // pred_check_branch
      %14 = sbr.rel (0) target = $region9
    $region8: #{tpu_custom_call.1} parent=1 // pred_region
      _
    $region9: #{tpu_custom_call.1} parent=1 // pred_fallthru
      _
    // Predicated region
    $region10: #{tpu_custom_call.1} parent=1 // pred_check
      _
    $region11: #{tpu_custom_call.1} parent=1 // pred_check_branch
      %16 = sbr.rel (0) target = $region13
    $region12: #{tpu_custom_call.1} parent=1 // pred_region
      _
    $region13: #{tpu_custom_call.1} parent=1 // pred_fallthru
      _
    // Predicated region
    $region14: #{tpu_custom_call.1} parent=1 // pred_check
      _
    $region15: #{tpu_custom_call.1} parent=1 // pred_check_branch
      %18 = sbr.rel (0) target = $region17
    $region16: #{tpu_custom_call.1} parent=1 // pred_region
      _
    $region17: #{tpu_custom_call.1} parent=1 // pred_fallthru
      _
    // Predicated region
    $region18: #{tpu_custom_call.1} parent=1 // pred_check
      _
    $region19: #{tpu_custom_call.1} parent=1 // pred_check_branch
      %20 = sbr.rel (0) target = $region21
    $region20: #{tpu_custom_call.1} parent=1 // pred_region
      _
    $region21: #{tpu_custom_call.1} parent=1 // pred_fallthru
      _
    %v21 = vld [vmem:[%s0] sm:$0xff]
    %v22 = vld [vmem:[%s0 + $0x8] sm:$0xff]
    %v23 = vld [vmem:[%s0 + $0x10] sm:$0xff]
    %v24 = vld [vmem:[%s0 + $0x18] sm:$0xff]
    %v25 = vld [vmem:[%s0 + $0x20] sm:$0xff]
    %v26 = vld [vmem:[%s0 + $0x28] sm:$0xff]
    %v27 = vld [vmem:[%s0 + $0x30] sm:$0xff]
    %v28 = vld [vmem:[%s0 + $0x38] sm:$0xff]
    %v29 = vld [vmem:[%s1] sm:$0xff]
    %v30 = vld [vmem:[%s1 + $0x8] sm:$0xff]
    %v31 = vld [vmem:[%s2] sm:$0xff]
    %v32 = vld [vmem:[%s2 + $0x8] sm:$0xff]
    %34 = vset.pattern.permute.xlu0 0
    %35 = vperm.xlu0 %34, %v31
    %v36 = vpop.permute.xlu0 %35
    %39 = vset.pattern.permute.xlu0 0
    %40 = vperm.xlu0 %39, %v32
    %v41 = vpop.permute.xlu0 %40
    %vm43 = vcmask 130048
    %v45 = vsel %vm43, %v29, 0
    %v48 = vsel %vm43, %v30, 0
    %50 = vmatprep.subr.mxu0 0.0
    %51 = vmatpush1.msra.mxu0 0.0
    %52 = vmatprep.subr.mxu0 0.0
    %53 = vmatpush1.msra.mxu0 0.0
    %54 = vmatprep.subr.mxu0 0.0
    %55 = vmatpush1.msra.mxu0 0.0
    %56 = vmatprep.subr.mxu0 0.0
    %57 = vmatpush1.msra.mxu0 0.0
    %58 = vmatprep.subr.mxu0 0.0
    %59 = vmatpush1.msra.mxu0 0.0
    %60 = vmatprep.subr.mxu0 0.0
    %61 = vmatpush1.msra.mxu0 0.0
    %62 = vmatprep.subr.mxu0 0.0
    %63 = vmatpush1.msra.mxu0 0.0
    %64 = vmatprep.subr.mxu0 0.0
    %65 = vmatpush1.msra.mxu0 0.0
    %66 = vmatprep.subr.mxu0 0.0
    %67 = vmatpush1.msra.mxu0 0.0
    %68 = vmatprep.subr.mxu0 0.0
    %69 = vmatpush1.msra.mxu0 0.0
    %70 = vmatprep.subr.mxu0 0.0
    %71 = vmatpush1.msra.mxu0 0.0
    %72 = vmatprep.subr.mxu0 0.0
    %73 = vmatpush1.msra.mxu0 0.0
    %74 = vmatprep.subr.mxu0 0.0
    %75 = vmatpush1.msra.mxu0 0.0
    %76 = vmatprep.subr.mxu0 0.0
    %77 = vmatpush1.msra.mxu0 0.0
    %78 = vmatprep.subr.mxu0 %v26
    %79 = vmatpush1.msra.mxu0 %v25
    %80 = vmatprep.subr.mxu0 %v22
    %81 = vmatpush1.msra.mxu0 %v21
    %82 = vmatprep.subr.mxu0 0.0
    %83 = vmatpush2.msra.mxu0 0.0
    %84 = vmatprep.subr.mxu0 0.0
    %85 = vmatpush2.msra.mxu0 0.0
    %86 = vmatprep.subr.mxu0 0.0
    %87 = vmatpush2.msra.mxu0 0.0
    %88 = vmatprep.subr.mxu0 0.0
    %89 = vmatpush2.msra.mxu0 0.0
    %90 = vmatprep.subr.mxu0 0.0
    %91 = vmatpush2.msra.mxu0 0.0
    %92 = vmatprep.subr.mxu0 0.0
    %93 = vmatpush2.msra.mxu0 0.0
    %94 = vmatprep.subr.mxu0 0.0
    %95 = vmatpush2.msra.mxu0 0.0
    %96 = vmatprep.subr.mxu0 0.0
    %97 = vmatpush2.msra.mxu0 0.0
    %98 = vmatprep.subr.mxu0 0.0
    %99 = vmatpush2.msra.mxu0 0.0
    %100 = vmatprep.subr.mxu0 0.0
    %101 = vmatpush2.msra.mxu0 0.0
    %102 = vmatprep.subr.mxu0 0.0
    %103 = vmatpush2.msra.mxu0 0.0
    %104 = vmatprep.subr.mxu0 0.0
    %105 = vmatpush2.msra.mxu0 0.0
    %106 = vmatprep.subr.mxu0 0.0
    %107 = vmatpush2.msra.mxu0 0.0
    %108 = vmatprep.subr.mxu0 0.0
    %109 = vmatpush2.msra.mxu0 0.0
    %110 = vmatprep.subr.mxu0 0.0
    %111 = vmatpush2.msra.mxu0 0.0
    %112 = vmatprep.subr.mxu0 0.0
    %113 = vmatpush2.msra.mxu0 0.0
    %114 = vmatprep.mubr.f32.mxu0 0.0
    %115 = vmatmul.mubr.f32.gmra.mxu0 %v45
    %v116 = vpop.f32.mrf.mxu0
    %v117 = vadd.f32 %v36, %v116
    %v118 = vpop.f32.mrf.mxu0
    %v119 = vadd.f32 %v36, %v118
    %120 = vmatprep.mubr.f32.mxu0 0.0
    %121 = vmatmul.mubr.f32.gmra.mxu0 %v48
    %v122 = vpop.f32.mrf.mxu0
    %v123 = vadd.f32 %v41, %v122
    %v124 = vpop.f32.mrf.mxu0
    %v125 = vadd.f32 %v41, %v124
    %126 = vdwg.mxu0
    %127 = vmatprep.subr.mxu0 0.0
    %128 = vmatpush1.msra.mxu0 0.0
    %129 = vmatprep.subr.mxu0 0.0
    %130 = vmatpush1.msra.mxu0 0.0
    %131 = vmatprep.subr.mxu0 0.0
    %132 = vmatpush1.msra.mxu0 0.0
    %133 = vmatprep.subr.mxu0 0.0
    %134 = vmatpush1.msra.mxu0 0.0
    %135 = vmatprep.subr.mxu0 0.0
    %136 = vmatpush1.msra.mxu0 0.0
    %137 = vmatprep.subr.mxu0 0.0
    %138 = vmatpush1.msra.mxu0 0.0
    %139 = vmatprep.subr.mxu0 0.0
    %140 = vmatpush1.msra.mxu0 0.0
    %141 = vmatprep.subr.mxu0 0.0
    %142 = vmatpush1.msra.mxu0 0.0
    %143 = vmatprep.subr.mxu0 0.0
    %144 = vmatpush1.msra.mxu0 0.0
    %145 = vmatprep.subr.mxu0 0.0
    %146 = vmatpush1.msra.mxu0 0.0
    %147 = vmatprep.subr.mxu0 0.0
    %148 = vmatpush1.msra.mxu0 0.0
    %149 = vmatprep.subr.mxu0 0.0
    %150 = vmatpush1.msra.mxu0 0.0
    %151 = vmatprep.subr.mxu0 0.0
    %152 = vmatpush1.msra.mxu0 0.0
    %153 = vmatprep.subr.mxu0 0.0
    %154 = vmatpush1.msra.mxu0 0.0
    %155 = vmatprep.subr.mxu0 %v28
    %156 = vmatpush1.msra.mxu0 %v27
    %157 = vmatprep.subr.mxu0 %v24
    %158 = vmatpush1.msra.mxu0 %v23
    %159 = vmatprep.subr.mxu0 0.0
    %160 = vmatpush2.msra.mxu0 0.0
    %161 = vmatprep.subr.mxu0 0.0
    %162 = vmatpush2.msra.mxu0 0.0
    %163 = vmatprep.subr.mxu0 0.0
    %164 = vmatpush2.msra.mxu0 0.0
    %165 = vmatprep.subr.mxu0 0.0
    %166 = vmatpush2.msra.mxu0 0.0
    %167 = vmatprep.subr.mxu0 0.0
    %168 = vmatpush2.msra.mxu0 0.0
    %169 = vmatprep.subr.mxu0 0.0
    %170 = vmatpush2.msra.mxu0 0.0
    %171 = vmatprep.subr.mxu0 0.0
    %172 = vmatpush2.msra.mxu0 0.0
    %173 = vmatprep.subr.mxu0 0.0
    %174 = vmatpush2.msra.mxu0 0.0
    %175 = vmatprep.subr.mxu0 0.0
    %176 = vmatpush2.msra.mxu0 0.0
    %177 = vmatprep.subr.mxu0 0.0
    %178 = vmatpush2.msra.mxu0 0.0
    %179 = vmatprep.subr.mxu0 0.0
    %180 = vmatpush2.msra.mxu0 0.0
    %181 = vmatprep.subr.mxu0 0.0
    %182 = vmatpush2.msra.mxu0 0.0
    %183 = vmatprep.subr.mxu0 0.0
    %184 = vmatpush2.msra.mxu0 0.0
    %185 = vmatprep.subr.mxu0 0.0
    %186 = vmatpush2.msra.mxu0 0.0
    %187 = vmatprep.subr.mxu0 0.0
    %188 = vmatpush2.msra.mxu0 0.0
    %189 = vmatprep.subr.mxu0 0.0
    %190 = vmatpush2.msra.mxu0 0.0
    %191 = vmatprep.mubr.f32.mxu0 0.0
    %192 = vmatmul.mubr.f32.gmra.mxu0 %v45
    %v193 = vpop.f32.mrf.mxu0
    %v194 = vadd.f32 %v36, %v193
    %v195 = vpop.f32.mrf.mxu0
    %v196 = vadd.f32 %v36, %v195
    %197 = vmatprep.mubr.f32.mxu0 0.0
    %198 = vmatmul.mubr.f32.gmra.mxu0 %v48
    %v199 = vpop.f32.mrf.mxu0
    %v200 = vadd.f32 %v41, %v199
    %v201 = vpop.f32.mrf.mxu0
    %v202 = vadd.f32 %v41, %v201
    %203 = vdwg.mxu0
    %v204 = vmul.f32 %v117, 0.5
    %v205 = vmul.f32 %v119, 0.5
    %v206 = vmul.f32 %v194, 0.5
    %v207 = vmul.f32 %v196, 0.5
    %v208 = vmul.f32 %v123, 0.5
    %v209 = vmul.f32 %v125, 0.5
    %v210 = vmul.f32 %v200, 0.5
    %v211 = vmul.f32 %v202, 0.5
    %v212 = vmul.f32 %v117, 0.70710677
    %v213 = vmul.f32 %v119, 0.70710677
    %v214 = vmul.f32 %v194, 0.70710677
    %v215 = vmul.f32 %v196, 0.70710677
    %v216 = vmul.f32 %v123, 0.70710677
    %v217 = vmul.f32 %v125, 0.70710677
    %v218 = vmul.f32 %v200, 0.70710677
    %v219 = vmul.f32 %v202, 0.70710677
    %v220 = verf.f32.pop %v212
    %v221 = verf.f32.pop %v213
    %v222 = verf.f32.pop %v214
    %v223 = verf.f32.pop %v215
    %v224 = verf.f32.pop %v216
    %v225 = verf.f32.pop %v217
    %v226 = verf.f32.pop %v218
    %v227 = verf.f32.pop %v219
    %v228 = vadd.f32 %v220, 1.0
    %v229 = vadd.f32 %v221, 1.0
    %v230 = vadd.f32 %v222, 1.0
    %v231 = vadd.f32 %v223, 1.0
    %v232 = vadd.f32 %v224, 1.0
    %v233 = vadd.f32 %v225, 1.0
    %v234 = vadd.f32 %v226, 1.0
    %v235 = vadd.f32 %v227, 1.0
    %v236 = vmul.f32 %v204, %v228
    %v237 = vmul.f32 %v205, %v229
    %v238 = vmul.f32 %v206, %v230
    %v239 = vmul.f32 %v207, %v231
    %v240 = vmul.f32 %v208, %v232
    %v241 = vmul.f32 %v209, %v233
    %v242 = vmul.f32 %v210, %v234
    %v243 = vmul.f32 %v211, %v235
    %v244 = vadd.f32 %v236, %v21
    %v245 = vadd.f32 %v237, %v22
    %v246 = vadd.f32 %v238, %v23
    %v247 = vadd.f32 %v239, %v24
    %v248 = vadd.f32 %v240, %v25
    %v249 = vadd.f32 %v241, %v26
    %v250 = vadd.f32 %v242, %v27
    %v251 = vadd.f32 %v243, %v28
    %v252 = vld [vmem:[%s3] sm:$0xff]
    %v253 = vld [vmem:[%s3 + $0x8] sm:$0xff]
    %v254 = vld [vmem:[%s3 + $0x10] sm:$0xff]
    %v255 = vld [vmem:[%s3 + $0x18] sm:$0xff]
    %v256 = vld [vmem:[%s3 + $0x20] sm:$0xff]
    %v257 = vld [vmem:[%s3 + $0x28] sm:$0xff]
    %v258 = vld [vmem:[%s3 + $0x30] sm:$0xff]
    %v259 = vld [vmem:[%s3 + $0x38] sm:$0xff]
    %v260 = vld [vmem:[%s3 + $0x40] sm:$0xff]
    %v261 = vld [vmem:[%s3 + $0x48] sm:$0xff]
    %v262 = vld [vmem:[%s3 + $0x50] sm:$0xff]
    %v263 = vld [vmem:[%s3 + $0x58] sm:$0xff]
    %v264 = vld [vmem:[%s3 + $0x60] sm:$0xff]
    %v265 = vld [vmem:[%s3 + $0x68] sm:$0xff]
    %v266 = vld [vmem:[%s3 + $0x70] sm:$0xff]
    %v267 = vld [vmem:[%s3 + $0x78] sm:$0xff]
    %v268 = vld [vmem:[%s3 + $0x80] sm:$0xff]
    %v269 = vld [vmem:[%s3 + $0x88] sm:$0xff]
    %v270 = vld [vmem:[%s3 + $0x90] sm:$0xff]
    %v271 = vld [vmem:[%s3 + $0x98] sm:$0xff]
    %v272 = vld [vmem:[%s3 + $0xa0] sm:$0xff]
    %v273 = vld [vmem:[%s3 + $0xa8] sm:$0xff]
    %v274 = vld [vmem:[%s3 + $0xb0] sm:$0xff]
    %v275 = vld [vmem:[%s3 + $0xb8] sm:$0xff]
    %v276 = vld [vmem:[%s3 + $0xc0] sm:$0xff]
    %v277 = vld [vmem:[%s3 + $0xc8] sm:$0xff]
    %v278 = vld [vmem:[%s3 + $0xd0] sm:$0xff]
    %v279 = vld [vmem:[%s3 + $0xd8] sm:$0xff]
    %v280 = vld [vmem:[%s3 + $0xe0] sm:$0xff]
    %v281 = vld [vmem:[%s3 + $0xe8] sm:$0xff]
    %v282 = vld [vmem:[%s3 + $0xf0] sm:$0xff]
    %v283 = vld [vmem:[%s3 + $0xf8] sm:$0xff]
    %v284 = vld [vmem:[%s3 + $0x100] sm:$0xff]
    %v285 = vld [vmem:[%s3 + $0x108] sm:$0xff]
    %v286 = vld [vmem:[%s3 + $0x110] sm:$0xff]
    %v287 = vld [vmem:[%s3 + $0x118] sm:$0xff]
    %v288 = vld [vmem:[%s3 + $0x120] sm:$0xff]
    %v289 = vld [vmem:[%s3 + $0x128] sm:$0xff]
    %v290 = vld [vmem:[%s3 + $0x130] sm:$0xff]
    %v291 = vld [vmem:[%s3 + $0x138] sm:$0xff]
    %v292 = vld [vmem:[%s3 + $0x140] sm:$0xff]
    %v293 = vld [vmem:[%s3 + $0x148] sm:$0xff]
    %v294 = vld [vmem:[%s3 + $0x150] sm:$0xff]
    %v295 = vld [vmem:[%s3 + $0x158] sm:$0xff]
    %v296 = vld [vmem:[%s3 + $0x160] sm:$0xff]
    %v297 = vld [vmem:[%s3 + $0x168] sm:$0xff]
    %v298 = vld [vmem:[%s3 + $0x170] sm:$0xff]
    %v299 = vld [vmem:[%s3 + $0x178] sm:$0xff]
    %v300 = vld [vmem:[%s3 + $0x180] sm:$0xff]
    %v301 = vld [vmem:[%s3 + $0x188] sm:$0xff]
    %v302 = vld [vmem:[%s3 + $0x190] sm:$0xff]
    %v303 = vld [vmem:[%s3 + $0x198] sm:$0xff]
    %v304 = vld [vmem:[%s3 + $0x1a0] sm:$0xff]
    %v305 = vld [vmem:[%s3 + $0x1a8] sm:$0xff]
    %v306 = vld [vmem:[%s3 + $0x1b0] sm:$0xff]
    %v307 = vld [vmem:[%s3 + $0x1b8] sm:$0xff]
    %v308 = vld [vmem:[%s3 + $0x1c0] sm:$0xff]
    %v309 = vld [vmem:[%s3 + $0x1c8] sm:$0xff]
    %v310 = vld [vmem:[%s3 + $0x1d0] sm:$0xff]
    %v311 = vld [vmem:[%s3 + $0x1d8] sm:$0xff]
    %v312 = vld [vmem:[%s3 + $0x1e0] sm:$0xff]
    %v313 = vld [vmem:[%s3 + $0x1e8] sm:$0xff]
    %v314 = vld [vmem:[%s3 + $0x1f0] sm:$0xff]
    %v315 = vld [vmem:[%s3 + $0x1f8] sm:$0xff]
    %v316 = vld [vmem:[%s4] sm:$0x1]
    %v318 = vlaneseq
    %v319 = vshrl.u32 %v318, 7
    %v320 = vsub.s32 0, %v319
    %v321 = vrot.slane %v316, %v320
    %323 = vmatprep.subr.mxu0 0.0
    %324 = vmatpush1.msra.mxu0 %v267
    %325 = vmatprep.subr.mxu0 0.0
    %326 = vmatpush1.msra.mxu0 %v266
    %327 = vmatprep.subr.mxu0 0.0
    %328 = vmatpush1.msra.mxu0 %v265
    %329 = vmatprep.subr.mxu0 0.0
    %330 = vmatpush1.msra.mxu0 %v264
    %331 = vmatprep.subr.mxu0 0.0
    %332 = vmatpush1.msra.mxu0 %v263
    %333 = vmatprep.subr.mxu0 0.0
    %334 = vmatpush1.msra.mxu0 %v262
    %335 = vmatprep.subr.mxu0 0.0
    %336 = vmatpush1.msra.mxu0 %v261
    %337 = vmatprep.subr.mxu0 0.0
    %338 = vmatpush1.msra.mxu0 %v260
    %339 = vmatprep.subr.mxu0 0.0
    %340 = vmatpush1.msra.mxu0 %v259
    %341 = vmatprep.subr.mxu0 0.0
    %342 = vmatpush1.msra.mxu0 %v258
    %343 = vmatprep.subr.mxu0 0.0
    %344 = vmatpush1.msra.mxu0 %v257
    %345 = vmatprep.subr.mxu0 0.0
    %346 = vmatpush1.msra.mxu0 %v256
    %347 = vmatprep.subr.mxu0 0.0
    %348 = vmatpush1.msra.mxu0 %v255
    %349 = vmatprep.subr.mxu0 0.0
    %350 = vmatpush1.msra.mxu0 %v254
    %351 = vmatprep.subr.mxu0 0.0
    %352 = vmatpush1.msra.mxu0 %v253
    %353 = vmatprep.subr.mxu0 0.0
    %354 = vmatpush1.msra.mxu0 %v252
    %355 = vmatprep.subr.mxu0 0.0
    %356 = vmatpush2.msra.mxu0 %v283
    %357 = vmatprep.subr.mxu0 0.0
    %358 = vmatpush2.msra.mxu0 %v282
    %359 = vmatprep.subr.mxu0 0.0
    %360 = vmatpush2.msra.mxu0 %v281
    %361 = vmatprep.subr.mxu0 0.0
    %362 = vmatpush2.msra.mxu0 %v280
    %363 = vmatprep.subr.mxu0 0.0
    %364 = vmatpush2.msra.mxu0 %v279
    %365 = vmatprep.subr.mxu0 0.0
    %366 = vmatpush2.msra.mxu0 %v278
    %367 = vmatprep.subr.mxu0 0.0
    %368 = vmatpush2.msra.mxu0 %v277
    %369 = vmatprep.subr.mxu0 0.0
    %370 = vmatpush2.msra.mxu0 %v276
    %371 = vmatprep.subr.mxu0 0.0
    %372 = vmatpush2.msra.mxu0 %v275
    %373 = vmatprep.subr.mxu0 0.0
    %374 = vmatpush2.msra.mxu0 %v274
    %375 = vmatprep.subr.mxu0 0.0
    %376 = vmatpush2.msra.mxu0 %v273
    %377 = vmatprep.subr.mxu0 0.0
    %378 = vmatpush2.msra.mxu0 %v272
    %379 = vmatprep.subr.mxu0 0.0
    %380 = vmatpush2.msra.mxu0 %v271
    %381 = vmatprep.subr.mxu0 0.0
    %382 = vmatpush2.msra.mxu0 %v270
    %383 = vmatprep.subr.mxu0 0.0
    %384 = vmatpush2.msra.mxu0 %v269
    %385 = vmatprep.subr.mxu0 0.0
    %386 = vmatpush2.msra.mxu0 %v268
    %387 = vmatprep.mubr.f32.mxu0 %v245
    %388 = vmatmul.mubr.f32.gmra.mxu0 %v244
    %v389 = vpop.f32.mrf.mxu0
    %v390 = vadd.f32 %v321, %v389
    %v391 = vpop.f32.mrf.mxu0
    %392 = vmatprep.mubr.f32.mxu0 %v249
    %393 = vmatmul.mubr.f32.gmra.mxu0 %v248
    %v394 = vpop.f32.mrf.mxu0
    %v395 = vadd.f32 %v321, %v394
    %v396 = vpop.f32.mrf.mxu0
    %397 = vdwg.mxu0
    %398 = vmatprep.subr.mxu0 0.0
    %399 = vmatpush1.msra.mxu0 %v299
    %400 = vmatprep.subr.mxu0 0.0
    %401 = vmatpush1.msra.mxu0 %v298
    %402 = vmatprep.subr.mxu0 0.0
    %403 = vmatpush1.msra.mxu0 %v297
    %404 = vmatprep.subr.mxu0 0.0
    %405 = vmatpush1.msra.mxu0 %v296
    %406 = vmatprep.subr.mxu0 0.0
    %407 = vmatpush1.msra.mxu0 %v295
    %408 = vmatprep.subr.mxu0 0.0
    %409 = vmatpush1.msra.mxu0 %v294
    %410 = vmatprep.subr.mxu0 0.0
    %411 = vmatpush1.msra.mxu0 %v293
    %412 = vmatprep.subr.mxu0 0.0
    %413 = vmatpush1.msra.mxu0 %v292
    %414 = vmatprep.subr.mxu0 0.0
    %415 = vmatpush1.msra.mxu0 %v291
    %416 = vmatprep.subr.mxu0 0.0
    %417 = vmatpush1.msra.mxu0 %v290
    %418 = vmatprep.subr.mxu0 0.0
    %419 = vmatpush1.msra.mxu0 %v289
    %420 = vmatprep.subr.mxu0 0.0
    %421 = vmatpush1.msra.mxu0 %v288
    %422 = vmatprep.subr.mxu0 0.0
    %423 = vmatpush1.msra.mxu0 %v287
    %424 = vmatprep.subr.mxu0 0.0
    %425 = vmatpush1.msra.mxu0 %v286
    %426 = vmatprep.subr.mxu0 0.0
    %427 = vmatpush1.msra.mxu0 %v285
    %428 = vmatprep.subr.mxu0 0.0
    %429 = vmatpush1.msra.mxu0 %v284
    %430 = vmatprep.subr.mxu0 0.0
    %431 = vmatpush2.msra.mxu0 %v315
    %432 = vmatprep.subr.mxu0 0.0
    %433 = vmatpush2.msra.mxu0 %v314
    %434 = vmatprep.subr.mxu0 0.0
    %435 = vmatpush2.msra.mxu0 %v313
    %436 = vmatprep.subr.mxu0 0.0
    %437 = vmatpush2.msra.mxu0 %v312
    %438 = vmatprep.subr.mxu0 0.0
    %439 = vmatpush2.msra.mxu0 %v311
    %440 = vmatprep.subr.mxu0 0.0
    %441 = vmatpush2.msra.mxu0 %v310
    %442 = vmatprep.subr.mxu0 0.0
    %443 = vmatpush2.msra.mxu0 %v309
    %444 = vmatprep.subr.mxu0 0.0
    %445 = vmatpush2.msra.mxu0 %v308
    %446 = vmatprep.subr.mxu0 0.0
    %447 = vmatpush2.msra.mxu0 %v307
    %448 = vmatprep.subr.mxu0 0.0
    %449 = vmatpush2.msra.mxu0 %v306
    %450 = vmatprep.subr.mxu0 0.0
    %451 = vmatpush2.msra.mxu0 %v305
    %452 = vmatprep.subr.mxu0 0.0
    %453 = vmatpush2.msra.mxu0 %v304
    %454 = vmatprep.subr.mxu0 0.0
    %455 = vmatpush2.msra.mxu0 %v303
    %456 = vmatprep.subr.mxu0 0.0
    %457 = vmatpush2.msra.mxu0 %v302
    %458 = vmatprep.subr.mxu0 0.0
    %459 = vmatpush2.msra.mxu0 %v301
    %460 = vmatprep.subr.mxu0 0.0
    %461 = vmatpush2.msra.mxu0 %v300
    %462 = vmatprep.mubr.f32.mxu0 %v247
    %463 = vmatmul.mubr.f32.gmra.mxu0 %v246
    %v464 = vpop.f32.mrf.mxu0
    %v465 = vadd.f32 %v390, %v464
    %v466 = vpop.f32.mrf.mxu0
    %467 = vmatprep.mubr.f32.mxu0 %v251
    %468 = vmatmul.mubr.f32.gmra.mxu0 %v250
    %v469 = vpop.f32.mrf.mxu0
    %v470 = vadd.f32 %v395, %v469
    %v471 = vpop.f32.mrf.mxu0
    %472 = vdwg.mxu0
    %vm473 = vcmask 523264
    %474 = vst.msk [vmem:[#allocation2] sm:$0xff] %vm473, %v465
    %475 = vst.msk [vmem:[#allocation2 + $0x8] sm:$0xff] %vm473, %v470
    // Predicated region
    $region22: #{tpu_custom_call.1} parent=1 // pred_check
      _
    $region23: #{tpu_custom_call.1} parent=1 // pred_check_branch
      %477 = sbr.rel (0) target = $region25
    $region24: #{tpu_custom_call.1} parent=1 // pred_region
      %s479 = ssub.s32 256, 256
      %480 = vsyncadd [#allocation3], %s479
      %s481 = sshll.u32 [#allocation2], 4
      %s482 = int_to_ptr.vmem [resolvable:$true] %s481
      %487 = dma.vmem_to_hbm [thread:$0]  %s482, 256, %s5, [#allocation3], 128, 128, 8
    $region25: #{tpu_custom_call.1} parent=1 // pred_fallthru
      _
    // Predicated region
    $region26: #{tpu_custom_call.1} parent=1 // pred_check
      _
    $region27: #{tpu_custom_call.1} parent=1 // pred_check_branch
      %489 = sbr.rel (0) target = $region29
    $region28: #{tpu_custom_call.1} parent=1 // pred_region
      %490 = dma.done [#allocation3], 256
    $region29: #{tpu_custom_call.1} parent=1 // pred_fallthru
      _
    %491 = vsyncpa [#allocation3], 1

</llo_original>
